<compile_context>
chip_gen: v5e
topology: v5e:2x2
jax: 0.10.0
libtpu: 0.0.40
codegen_flags: <defaults>
</compile_context>

<pallas_src>
import functools

import jax
import jax.numpy as jnp
from jax import lax
from jax.experimental import pallas as pl
from jax.experimental.pallas import tpu as pltpu

BN_EPS = 1e-5
LANE = 128      # lane width: all feature dims padded to a multiple of this
SUBLANE = 16    # sublane multiple (bf16-safe); batch padded to a multiple of this


def _round_up(x, m):
    return (x + m - 1) // m * m


def _mlp_kernel(x_ref,
                w1_ref, b1_ref, g1_ref, be1_ref,
                w2_ref, b2_ref, g2_ref, be2_ref,
                w3_ref, b3_ref,
                o_ref, *, batch, matmul_dtype):
    """Fused linear1 -> bn1 -> relu -> linear2 -> bn2 -> relu -> linear3.

    All arrays arrive padded (lane-dense features, sublane-padded batch);
    `batch` is the number of *real* rows so BatchNorm statistics ignore the
    padded rows (padded rows carry garbage but never contaminate real rows and
    are sliced off by the wrapper).
    """
    b_pad = x_ref.shape[0]
    inv_b = jnp.float32(1.0 / batch)

    if b_pad != batch:
        row_ids = lax.broadcasted_iota(jnp.int32, (b_pad, 1), 0)
        row_mask = (row_ids < batch).astype(jnp.float32)
    else:
        row_mask = None

    def batchnorm_relu(h, g, be):
        # Concurrent sum / sum-of-squares; var = E[h^2] - mu^2 (all f32).
        if row_mask is None:
            s1 = jnp.sum(h, axis=0, keepdims=True)
            s2 = jnp.sum(h * h, axis=0, keepdims=True)
        else:
            s1 = jnp.sum(h * row_mask, axis=0, keepdims=True)
            s2 = jnp.sum((h * h) * row_mask, axis=0, keepdims=True)
        mu = s1 * inv_b
        var = jnp.maximum(s2 * inv_b - mu * mu, 0.0)
        scale = lax.rsqrt(var + BN_EPS) * g          # (1, n) — EUP rsqrt
        shift = be - mu * scale
        return jnp.maximum(h * scale + shift, 0.0)   # fused BN affine + ReLU

    # ---- linear1 : (Bp, n_i_p) @ (n_i_p, n_h_p) + b1 ----
    h = jnp.dot(x_ref[...], w1_ref[...],
                preferred_element_type=jnp.float32) + b1_ref[...]
    # ---- bn1 + relu1 ----
    h = batchnorm_relu(h, g1_ref[...], be1_ref[...])

    # ---- linear2 : (Bp, n_h_p) @ (n_h_p, n_o_p) + b2 ----
    h = jnp.dot(h.astype(matmul_dtype), w2_ref[...],
                preferred_element_type=jnp.float32) + b2_ref[...]
    # ---- bn2 + relu2 ----
    h = batchnorm_relu(h, g2_ref[...], be2_ref[...])

    # ---- linear3 : (Bp, n_o_p) @ (n_o_p, n_l_p) + b3 ----  (lane-dense store)
    o_ref[...] = (jnp.dot(h.astype(matmul_dtype), w3_ref[...],
                          preferred_element_type=jnp.float32)
                  + b3_ref[...]).astype(o_ref.dtype)


def mlp_forward(x, params, *, matmul_dtype=jnp.float32):
    """Full MLP forward pass in one Pallas kernel.

    x: (B, n_i) float32.  params: dict from init_params.
    matmul_dtype: jnp.float32 (exact) or jnp.bfloat16 (v6e/v7x MXU fast path;
    BN statistics and accumulation stay f32).
    """
    B, n_i = x.shape
    n_h = params["w1"].shape[1]
    n_o = params["w2"].shape[1]
    n_l = params["w3"].shape[1]

    # Padded, lane-dense shapes.
    Bp = _round_up(B, SUBLANE)
    n_i_p = _round_up(n_i, LANE)
    n_h_p = _round_up(n_h, LANE)
    n_o_p = _round_up(n_o, LANE)
    n_l_p = _round_up(n_l, LANE)

    def pad2(a, rows, cols, fill=0.0):
        return jnp.pad(a, ((0, rows - a.shape[0]), (0, cols - a.shape[1])),
                       constant_values=fill)

    x_p = pad2(x, Bp, n_i_p).astype(matmul_dtype)
    w1 = pad2(params["w1"], n_i_p, n_h_p).astype(matmul_dtype)
    w2 = pad2(params["w2"], n_h_p, n_o_p).astype(matmul_dtype)
    w3 = pad2(params["w3"], n_o_p, n_l_p).astype(matmul_dtype)
    b1 = pad2(params["b1"], 1, n_h_p).astype(jnp.float32)
    b2 = pad2(params["b2"], 1, n_o_p).astype(jnp.float32)
    b3 = pad2(params["b3"], 1, n_l_p).astype(jnp.float32)
    g1 = pad2(params["g1"], 1, n_h_p, fill=1.0).astype(jnp.float32)
    g2 = pad2(params["g2"], 1, n_o_p, fill=1.0).astype(jnp.float32)
    be1 = pad2(params["be1"], 1, n_h_p).astype(jnp.float32)
    be2 = pad2(params["be2"], 1, n_o_p).astype(jnp.float32)

    args = (x_p, w1, b1, g1, be1, w2, b2, g2, be2, w3, b3)

    # Explicit VMEM budget (everything is resident; cap at v7x's 64 MiB).
    out_bytes = Bp * n_l_p * 4
    total_bytes = sum(int(a.size) * a.dtype.itemsize for a in args) + out_bytes
    vmem_limit = int(min(64 * 1024 * 1024,
                         max(32 * 1024 * 1024, 2 * total_bytes + (4 << 20))))

    cost = pl.CostEstimate(
        flops=2 * Bp * (n_i_p * n_h_p + n_h_p * n_o_p + n_o_p * n_l_p),
        transcendentals=n_h_p + n_o_p,          # one rsqrt per BN channel
        bytes_accessed=total_bytes,
    )

    vmem_spec = pl.BlockSpec(memory_space=pltpu.MemorySpace.VMEM)

    kernel = functools.partial(_mlp_kernel, batch=B, matmul_dtype=matmul_dtype)

    out_p = pl.pallas_call(
        kernel,
        out_shape=jax.ShapeDtypeStruct((Bp, n_l_p), jnp.float32),
        in_specs=[vmem_spec] * len(args),
        out_specs=vmem_spec,
        compiler_params=pltpu.CompilerParams(vmem_limit_bytes=vmem_limit),
        cost_estimate=cost,
    )(*args)

    # Strip batch/lane padding.
    return out_p[:B, :n_l]


def init_params(key, n_i, n_h, n_o, n_l):
    """Deterministic parameter init (synthetic; shapes match nn.Module)."""
    ks = jax.random.split(key, 6)

    def lin(k, fan_in, fan_out):
        bound = 1.0 / jnp.sqrt(fan_in)
        kw, kb = jax.random.split(k)
        w = jax.random.uniform(kw, (fan_in, fan_out), jnp.float32, -bound, bound)
        b = jax.random.uniform(kb, (1, fan_out), jnp.float32, -bound, bound)
        return w, b

    w1, b1 = lin(ks[0], n_i, n_h)
    w2, b2 = lin(ks[1], n_h, n_o)
    w3, b3 = lin(ks[2], n_o, n_l)

    # BatchNorm1d affine params (PyTorch default init: gamma=1, beta=0).
    g1 = jnp.ones((1, n_h), jnp.float32)
    be1 = jnp.zeros((1, n_h), jnp.float32)
    g2 = jnp.ones((1, n_o), jnp.float32)
    be2 = jnp.zeros((1, n_o), jnp.float32)

    return dict(w1=w1, b1=b1, g1=g1, be1=be1,
                w2=w2, b2=b2, g2=g2, be2=be2,
                w3=w3, b3=b3)


def _reference(x, p):
    """Plain-JAX reference (training-mode BN, biased variance)."""
    def bn(h, g, b):
        mu = jnp.mean(h, axis=0, keepdims=True)
        var = jnp.mean((h - mu) ** 2, axis=0, keepdims=True)
        return (h - mu) / jnp.sqrt(var + BN_EPS) * g + b

    h = x @ p["w1"] + p["b1"]
    h = jnp.maximum(bn(h, p["g1"], p["be1"]), 0.0)
    h = h @ p["w2"] + p["b2"]
    h = jnp.maximum(bn(h, p["g2"], p["be2"]), 0.0)
    return h @ p["w3"] + p["b3"]


if __name__ == "__main__":
    # Small, module-consistent shapes: MLP(n_i=32, n_h=64, n_o=48, n_l=16), batch=8.
    B, n_i, n_h, n_o, n_l = 8, 32, 64, 48, 16

    key = jax.random.PRNGKey(0)
    kx, kp = jax.random.split(key)
    x = jax.random.normal(kx, (B, n_i), jnp.float32)
    params = init_params(kp, n_i, n_h, n_o, n_l)

    ref = _reference(x, params)

    # f32 MXU path — strict correctness check.
    out = jax.block_until_ready(mlp_forward(x, params))
    assert out.shape == (B, n_l)
    assert jnp.allclose(out, ref, atol=1e-4, rtol=1e-4)

    # bf16 MXU fast path (v6e/v7x) — same semantics within bf16 precision.
    out_bf16 = jax.block_until_ready(
        mlp_forward(x, params, matmul_dtype=jnp.bfloat16))
    assert out_bf16.shape == (B, n_l)
    assert jnp.allclose(out_bf16, ref, atol=1e-1, rtol=1e-1)

    print("KERNEL_OK")
</pallas_src>

<mosaic_0001>
module attributes {stable_mosaic.version = 11 : i64} {
  func.func @_mlp_kernel(%arg0: memref<16x128xf32, #tpu.memory_space<vmem>>, %arg1: memref<128x128xf32, #tpu.memory_space<vmem>>, %arg2: memref<1x128xf32, #tpu.memory_space<vmem>>, %arg3: memref<1x128xf32, #tpu.memory_space<vmem>>, %arg4: memref<1x128xf32, #tpu.memory_space<vmem>>, %arg5: memref<128x128xf32, #tpu.memory_space<vmem>>, %arg6: memref<1x128xf32, #tpu.memory_space<vmem>>, %arg7: memref<1x128xf32, #tpu.memory_space<vmem>>, %arg8: memref<1x128xf32, #tpu.memory_space<vmem>>, %arg9: memref<128x128xf32, #tpu.memory_space<vmem>>, %arg10: memref<1x128xf32, #tpu.memory_space<vmem>>, %arg11: memref<16x128xf32, #tpu.memory_space<vmem>>) attributes {dimension_semantics = [], scalar_prefetch = 0 : i64, scratch_operands = 0 : i64, tpu.core_type = #tpu.core_type<tc>} {
    %0 = tpu.iota {dimensions = array<i32: 0>} : vector<16x1xi32>
    %c8_i32 = arith.constant 8 : i32
    %1 = vector.broadcast %c8_i32 : i32 to vector<16x1xi32>
    %2 = arith.cmpi slt, %0, %1 : vector<16x1xi32>
    %3 = arith.extui %2 : vector<16x1xi1> to vector<16x1xi32>
    %4 = arith.sitofp %3 : vector<16x1xi32> to vector<16x1xf32>
    %c0 = arith.constant 0 : index
    %c0_0 = arith.constant 0 : index
    %5 = vector.load %arg0[%c0, %c0_0] : memref<16x128xf32, #tpu.memory_space<vmem>>, vector<16x128xf32>
    %c0_1 = arith.constant 0 : index
    %c0_2 = arith.constant 0 : index
    %6 = vector.load %arg1[%c0_1, %c0_2] : memref<128x128xf32, #tpu.memory_space<vmem>>, vector<128x128xf32>
    %cst = arith.constant dense<0.000000e+00> : vector<16x128xf32>
    %7 = tpu.matmul %5, %6, %cst {dimension_numbers = #tpu.dot_dimension_numbers<[1], [0], [0], [1], [0, 0, 1, 1], [], []>} : vector<16x128xf32>, vector<128x128xf32>, vector<16x128xf32> -> vector<16x128xf32>
    %c0_3 = arith.constant 0 : index
    %c0_4 = arith.constant 0 : index
    %8 = vector.load %arg2[%c0_3, %c0_4] : memref<1x128xf32, #tpu.memory_space<vmem>>, vector<1x128xf32>
    %9 = vector.broadcast %8 : vector<1x128xf32> to vector<16x128xf32>
    %10 = arith.addf %7, %9 : vector<16x128xf32>
    %c0_5 = arith.constant 0 : index
    %c0_6 = arith.constant 0 : index
    %11 = vector.load %arg3[%c0_5, %c0_6] : memref<1x128xf32, #tpu.memory_space<vmem>>, vector<1x128xf32>
    %c0_7 = arith.constant 0 : index
    %c0_8 = arith.constant 0 : index
    %12 = vector.load %arg4[%c0_7, %c0_8] : memref<1x128xf32, #tpu.memory_space<vmem>>, vector<1x128xf32>
    %13 = vector.broadcast %4 : vector<16x1xf32> to vector<16x128xf32>
    %14 = arith.mulf %10, %13 : vector<16x128xf32>
    %cst_9 = arith.constant dense<0.000000e+00> : vector<128xf32>
    %15 = vector.multi_reduction <add>, %14, %cst_9 [0] : vector<16x128xf32> to vector<128xf32>
    %16 = vector.shape_cast %15 : vector<128xf32> to vector<1x128xf32>
    %17 = arith.mulf %10, %10 : vector<16x128xf32>
    %18 = vector.broadcast %4 : vector<16x1xf32> to vector<16x128xf32>
    %19 = arith.mulf %17, %18 : vector<16x128xf32>
    %cst_10 = arith.constant dense<0.000000e+00> : vector<128xf32>
    %20 = vector.multi_reduction <add>, %19, %cst_10 [0] : vector<16x128xf32> to vector<128xf32>
    %21 = vector.shape_cast %20 : vector<128xf32> to vector<1x128xf32>
    %cst_11 = arith.constant 1.250000e-01 : f32
    %22 = vector.broadcast %cst_11 : f32 to vector<1x128xf32>
    %23 = arith.mulf %16, %22 : vector<1x128xf32>
    %cst_12 = arith.constant 1.250000e-01 : f32
    %24 = vector.broadcast %cst_12 : f32 to vector<1x128xf32>
    %25 = arith.mulf %21, %24 : vector<1x128xf32>
    %26 = arith.mulf %23, %23 : vector<1x128xf32>
    %27 = arith.subf %25, %26 : vector<1x128xf32>
    %cst_13 = arith.constant 0.000000e+00 : f32
    %28 = vector.broadcast %cst_13 : f32 to vector<1x128xf32>
    %29 = arith.maximumf %27, %28 : vector<1x128xf32>
    %cst_14 = arith.constant 9.99999974E-6 : f32
    %30 = vector.broadcast %cst_14 : f32 to vector<1x128xf32>
    %31 = arith.addf %29, %30 : vector<1x128xf32>
    %32 = math.rsqrt %31 : vector<1x128xf32>
    %33 = arith.mulf %32, %11 : vector<1x128xf32>
    %34 = arith.mulf %23, %33 : vector<1x128xf32>
    %35 = arith.subf %12, %34 : vector<1x128xf32>
    %36 = vector.broadcast %33 : vector<1x128xf32> to vector<16x128xf32>
    %37 = arith.mulf %10, %36 : vector<16x128xf32>
    %38 = vector.broadcast %35 : vector<1x128xf32> to vector<16x128xf32>
    %39 = arith.addf %37, %38 : vector<16x128xf32>
    %cst_15 = arith.constant 0.000000e+00 : f32
    %40 = vector.broadcast %cst_15 : f32 to vector<16x128xf32>
    %41 = arith.maximumf %39, %40 : vector<16x128xf32>
    %c0_16 = arith.constant 0 : index
    %c0_17 = arith.constant 0 : index
    %42 = vector.load %arg5[%c0_16, %c0_17] : memref<128x128xf32, #tpu.memory_space<vmem>>, vector<128x128xf32>
    %cst_18 = arith.constant dense<0.000000e+00> : vector<16x128xf32>
    %43 = tpu.matmul %41, %42, %cst_18 {dimension_numbers = #tpu.dot_dimension_numbers<[1], [0], [0], [1], [0, 0, 1, 1], [], []>} : vector<16x128xf32>, vector<128x128xf32>, vector<16x128xf32> -> vector<16x128xf32>
    %c0_19 = arith.constant 0 : index
    %c0_20 = arith.constant 0 : index
    %44 = vector.load %arg6[%c0_19, %c0_20] : memref<1x128xf32, #tpu.memory_space<vmem>>, vector<1x128xf32>
    %45 = vector.broadcast %44 : vector<1x128xf32> to vector<16x128xf32>
    %46 = arith.addf %43, %45 : vector<16x128xf32>
    %c0_21 = arith.constant 0 : index
    %c0_22 = arith.constant 0 : index
    %47 = vector.load %arg7[%c0_21, %c0_22] : memref<1x128xf32, #tpu.memory_space<vmem>>, vector<1x128xf32>
    %c0_23 = arith.constant 0 : index
    %c0_24 = arith.constant 0 : index
    %48 = vector.load %arg8[%c0_23, %c0_24] : memref<1x128xf32, #tpu.memory_space<vmem>>, vector<1x128xf32>
    %49 = vector.broadcast %4 : vector<16x1xf32> to vector<16x128xf32>
    %50 = arith.mulf %46, %49 : vector<16x128xf32>
    %cst_25 = arith.constant dense<0.000000e+00> : vector<128xf32>
    %51 = vector.multi_reduction <add>, %50, %cst_25 [0] : vector<16x128xf32> to vector<128xf32>
    %52 = vector.shape_cast %51 : vector<128xf32> to vector<1x128xf32>
    %53 = arith.mulf %46, %46 : vector<16x128xf32>
    %54 = vector.broadcast %4 : vector<16x1xf32> to vector<16x128xf32>
    %55 = arith.mulf %53, %54 : vector<16x128xf32>
    %cst_26 = arith.constant dense<0.000000e+00> : vector<128xf32>
    %56 = vector.multi_reduction <add>, %55, %cst_26 [0] : vector<16x128xf32> to vector<128xf32>
    %57 = vector.shape_cast %56 : vector<128xf32> to vector<1x128xf32>
    %cst_27 = arith.constant 1.250000e-01 : f32
    %58 = vector.broadcast %cst_27 : f32 to vector<1x128xf32>
    %59 = arith.mulf %52, %58 : vector<1x128xf32>
    %cst_28 = arith.constant 1.250000e-01 : f32
    %60 = vector.broadcast %cst_28 : f32 to vector<1x128xf32>
    %61 = arith.mulf %57, %60 : vector<1x128xf32>
    %62 = arith.mulf %59, %59 : vector<1x128xf32>
    %63 = arith.subf %61, %62 : vector<1x128xf32>
    %cst_29 = arith.constant 0.000000e+00 : f32
    %64 = vector.broadcast %cst_29 : f32 to vector<1x128xf32>
    %65 = arith.maximumf %63, %64 : vector<1x128xf32>
    %cst_30 = arith.constant 9.99999974E-6 : f32
    %66 = vector.broadcast %cst_30 : f32 to vector<1x128xf32>
    %67 = arith.addf %65, %66 : vector<1x128xf32>
    %68 = math.rsqrt %67 : vector<1x128xf32>
    %69 = arith.mulf %68, %47 : vector<1x128xf32>
    %70 = arith.mulf %59, %69 : vector<1x128xf32>
    %71 = arith.subf %48, %70 : vector<1x128xf32>
    %72 = vector.broadcast %69 : vector<1x128xf32> to vector<16x128xf32>
    %73 = arith.mulf %46, %72 : vector<16x128xf32>
    %74 = vector.broadcast %71 : vector<1x128xf32> to vector<16x128xf32>
    %75 = arith.addf %73, %74 : vector<16x128xf32>
    %cst_31 = arith.constant 0.000000e+00 : f32
    %76 = vector.broadcast %cst_31 : f32 to vector<16x128xf32>
    %77 = arith.maximumf %75, %76 : vector<16x128xf32>
    %c0_32 = arith.constant 0 : index
    %c0_33 = arith.constant 0 : index
    %78 = vector.load %arg9[%c0_32, %c0_33] : memref<128x128xf32, #tpu.memory_space<vmem>>, vector<128x128xf32>
    %cst_34 = arith.constant dense<0.000000e+00> : vector<16x128xf32>
    %79 = tpu.matmul %77, %78, %cst_34 {dimension_numbers = #tpu.dot_dimension_numbers<[1], [0], [0], [1], [0, 0, 1, 1], [], []>} : vector<16x128xf32>, vector<128x128xf32>, vector<16x128xf32> -> vector<16x128xf32>
    %c0_35 = arith.constant 0 : index
    %c0_36 = arith.constant 0 : index
    %80 = vector.load %arg10[%c0_35, %c0_36] : memref<1x128xf32, #tpu.memory_space<vmem>>, vector<1x128xf32>
    %81 = vector.broadcast %80 : vector<1x128xf32> to vector<16x128xf32>
    %82 = arith.addf %79, %81 : vector<16x128xf32>
    %c0_37 = arith.constant 0 : index
    %c0_38 = arith.constant 0 : index
    %83 = vector.load %arg11[%c0_37, %c0_38] : memref<16x128xf32, #tpu.memory_space<vmem>>, vector<16x128xf32>
    tpu.vector_store %arg11[%c0_37, %c0_38], %82 {strides = array<i32>} : memref<16x128xf32, #tpu.memory_space<vmem>>, vector<16x128xf32>,
    return
  }
}

</mosaic_0001>

<llo_original>
// kernel: tpu_custom_call.1
$region0: #{tpu_custom_call.1}
  #allocation0 [shape = 'u32[]', space=smem, size = 0x4, offset = 0x4, fixed_abs, tag = 'smem constant byte address 0x4 - core index']
  #allocation1 [shape = 'u32[72,128]{1,0:T(1,128)}', space=vmem, size = 0x9000, scoped, tag = 'internal scratch']
  %s0 = inlined_call_operand.hbm [shape: f32[16,128], index: 0, kind: input, shape index: {}]
  %s1 = inlined_call_operand.hbm [shape: f32[128,128], index: 1, kind: input, shape index: {}]
  %s2 = inlined_call_operand.vmem [shape: f32[1,128], index: 2, kind: input, shape index: {}]
  %s3 = inlined_call_operand.vmem [shape: f32[1,128], index: 3, kind: input, shape index: {}]
  %s4 = inlined_call_operand.vmem [shape: f32[1,128], index: 4, kind: input, shape index: {}]
  %s5 = inlined_call_operand.hbm [shape: f32[128,128], index: 5, kind: input, shape index: {}]
  %s6 = inlined_call_operand.vmem [shape: f32[1,128], index: 6, kind: input, shape index: {}]
  %s7 = inlined_call_operand.vmem [shape: f32[1,128], index: 7, kind: input, shape index: {}]
  %s8 = inlined_call_operand.vmem [shape: f32[1,128], index: 8, kind: input, shape index: {}]
  %s9 = inlined_call_operand.hbm [shape: f32[128,128], index: 9, kind: input, shape index: {}]
  %s10 = inlined_call_operand.vmem [shape: f32[1,128], index: 10, kind: input, shape index: {}]
  %s11 = inlined_call_operand.hbm [shape: f32[16,128], index: 11, kind: output, shape index: {}]
  %s12 = sld [smem:[#allocation0]]
  $region70: #{tpu_custom_call.1} parent=0
    _
  %s14 = ssub.s32 1, %s12
  %s15 = scalar_select 0, %s14, %s12
  $region1: #{tpu_custom_call.1} parent=0
    #allocation2 [shape = 'u8[8192]{0}', space=vmem, size = 0x2000, scoped, tag = 'input window, operand 0, single buffered']
    #allocation3 [shape = 's32[1]{0}', space=sflag, size = 0x4, scoped, tag = 'scoped memory for tpu_custom_call.1']
    #allocation4 [shape = 's32[1]{0}', space=sflag, size = 0x4, scoped, tag = 'scoped memory for tpu_custom_call.1']
    #allocation5 [shape = 'u8[65536]{0}', space=vmem, size = 0x10000, scoped, tag = 'input window, operand 1, single buffered']
    #allocation6 [shape = 's32[1]{0}', space=sflag, size = 0x4, scoped, tag = 'scoped memory for tpu_custom_call.1']
    #allocation7 [shape = 'u8[65536]{0}', space=vmem, size = 0x10000, scoped, tag = 'input window, operand 5, single buffered']
    #allocation8 [shape = 'u8[65536]{0}', space=vmem, size = 0x10000, scoped, tag = 'input window, operand 9, single buffered']
    #allocation9 [shape = 's32[1]{0}', space=sflag, size = 0x4, scoped, tag = 'scoped memory for tpu_custom_call.1']
    #allocation10 [shape = 'u8[8192]{0}', space=vmem, size = 0x2000, scoped, tag = 'output window, operand 0, single buffered']
    %16 = vsyncpa [#allocation3], 0
    %17 = vsyncpa [#allocation6], 0
    %18 = vsyncpa [#allocation9], 0
    %19 = vsyncpa [#allocation4], 0
    // Predicated region
    $region2: #{tpu_custom_call.1} parent=1 // pred_check
      _
    $region3: #{tpu_custom_call.1} parent=1 // pred_check_branch
      %21 = sbr.rel (0) target = $region5
    $region4: #{tpu_custom_call.1} parent=1 // pred_region
      %23 = vsyncadd [#allocation3], 0
      %s24 = sshll.u32 %s0, 4
      %s25 = int_to_ptr.hbm [resolvable:$true] %s24
      %s26 = sshll.u32 [#allocation2], 4
      %s27 = int_to_ptr.vmem [resolvable:$true] %s26
      %32 = dma.hbm_to_vmem [thread:$0]  %s25, 256, %s27, [#allocation3], 128, 128, 8
    $region5: #{tpu_custom_call.1} parent=1 // pred_fallthru
      _
    // Predicated region
    $region6: #{tpu_custom_call.1} parent=1 // pred_check
      _
    $region7: #{tpu_custom_call.1} parent=1 // pred_check_branch
      %34 = sbr.rel (0) target = $region9
    $region8: #{tpu_custom_call.1} parent=1 // pred_region
      %36 = vsyncadd [#allocation6], 0
      %s37 = sshll.u32 %s1, 4
      %s38 = int_to_ptr.hbm [resolvable:$true] %s37
      %s39 = sshll.u32 [#allocation5], 4
      %s40 = int_to_ptr.vmem [resolvable:$true] %s39
      %45 = dma.hbm_to_vmem [thread:$0]  %s38, 2048, %s40, [#allocation6], 128, 128, 8
    $region9: #{tpu_custom_call.1} parent=1 // pred_fallthru
      _
    // Predicated region
    $region10: #{tpu_custom_call.1} parent=1 // pred_check
      _
    $region11: #{tpu_custom_call.1} parent=1 // pred_check_branch
      %47 = sbr.rel (0) target = $region13
    $region12: #{tpu_custom_call.1} parent=1 // pred_region
      _
    $region13: #{tpu_custom_call.1} parent=1 // pred_fallthru
      _
    // Predicated region
    $region14: #{tpu_custom_call.1} parent=1 // pred_check
      _
    $region15: #{tpu_custom_call.1} parent=1 // pred_check_branch
      %49 = sbr.rel (0) target = $region17
    $region16: #{tpu_custom_call.1} parent=1 // pred_region
      _
    $region17: #{tpu_custom_call.1} parent=1 // pred_fallthru
      _
    // Predicated region
    $region18: #{tpu_custom_call.1} parent=1 // pred_check
      _
    $region19: #{tpu_custom_call.1} parent=1 // pred_check_branch
      %51 = sbr.rel (0) target = $region21
    $region20: #{tpu_custom_call.1} parent=1 // pred_region
      _
    $region21: #{tpu_custom_call.1} parent=1 // pred_fallthru
      _
    // Predicated region
    $region22: #{tpu_custom_call.1} parent=1 // pred_check
      _
    $region23: #{tpu_custom_call.1} parent=1 // pred_check_branch
      %53 = sbr.rel (0) target = $region25
    $region24: #{tpu_custom_call.1} parent=1 // pred_region
      %55 = vsyncadd [#allocation6], 0
      %s56 = sshll.u32 %s5, 4
      %s57 = int_to_ptr.hbm [resolvable:$true] %s56
      %s58 = sshll.u32 [#allocation7], 4
      %s59 = int_to_ptr.vmem [resolvable:$true] %s58
      %64 = dma.hbm_to_vmem [thread:$0]  %s57, 2048, %s59, [#allocation6], 128, 128, 8
    $region25: #{tpu_custom_call.1} parent=1 // pred_fallthru
      _
    // Predicated region
    $region26: #{tpu_custom_call.1} parent=1 // pred_check
      _
    $region27: #{tpu_custom_call.1} parent=1 // pred_check_branch
      %66 = sbr.rel (0) target = $region29
    $region28: #{tpu_custom_call.1} parent=1 // pred_region
      _
    $region29: #{tpu_custom_call.1} parent=1 // pred_fallthru
      _
    // Predicated region
    $region30: #{tpu_custom_call.1} parent=1 // pred_check
      _
    $region31: #{tpu_custom_call.1} parent=1 // pred_check_branch
      %68 = sbr.rel (0) target = $region33
    $region32: #{tpu_custom_call.1} parent=1 // pred_region
      _
    $region33: #{tpu_custom_call.1} parent=1 // pred_fallthru
      _
    // Predicated region
    $region34: #{tpu_custom_call.1} parent=1 // pred_check
      _
    $region35: #{tpu_custom_call.1} parent=1 // pred_check_branch
      %70 = sbr.rel (0) target = $region37
    $region36: #{tpu_custom_call.1} parent=1 // pred_region
      _
    $region37: #{tpu_custom_call.1} parent=1 // pred_fallthru
      _
    // Predicated region
    $region38: #{tpu_custom_call.1} parent=1 // pred_check
      _
    $region39: #{tpu_custom_call.1} parent=1 // pred_check_branch
      %72 = sbr.rel (0) target = $region41
    $region40: #{tpu_custom_call.1} parent=1 // pred_region
      %74 = vsyncadd [#allocation9], 0
      %s75 = sshll.u32 %s9, 4
      %s76 = int_to_ptr.hbm [resolvable:$true] %s75
      %s77 = sshll.u32 [#allocation8], 4
      %s78 = int_to_ptr.vmem [resolvable:$true] %s77
      %83 = dma.hbm_to_vmem [thread:$0]  %s76, 2048, %s78, [#allocation9], 128, 128, 8
    $region41: #{tpu_custom_call.1} parent=1 // pred_fallthru
      _
    // Predicated region
    $region42: #{tpu_custom_call.1} parent=1 // pred_check
      _
    $region43: #{tpu_custom_call.1} parent=1 // pred_check_branch
      %85 = sbr.rel (0) target = $region45
    $region44: #{tpu_custom_call.1} parent=1 // pred_region
      _
    $region45: #{tpu_custom_call.1} parent=1 // pred_fallthru
      _
    // Predicated region
    $region46: #{tpu_custom_call.1} parent=1 // pred_check
      _
    $region47: #{tpu_custom_call.1} parent=1 // pred_check_branch
      %87 = sbr.rel (0) target = $region49
    $region48: #{tpu_custom_call.1} parent=1 // pred_region
      %89 = dma.done [#allocation3], 256
    $region49: #{tpu_custom_call.1} parent=1 // pred_fallthru
      _
    // Predicated region
    $region50: #{tpu_custom_call.1} parent=1 // pred_check
      _
    $region51: #{tpu_custom_call.1} parent=1 // pred_check_branch
      %91 = sbr.rel (0) target = $region53
    $region52: #{tpu_custom_call.1} parent=1 // pred_region
      %93 = dma.done [#allocation6], 2048
    $region53: #{tpu_custom_call.1} parent=1 // pred_fallthru
      _
    // Predicated region
    $region54: #{tpu_custom_call.1} parent=1 // pred_check
      _
    $region55: #{tpu_custom_call.1} parent=1 // pred_check_branch
      %95 = sbr.rel (0) target = $region57
    $region56: #{tpu_custom_call.1} parent=1 // pred_region
      %97 = dma.done [#allocation6], 2048
    $region57: #{tpu_custom_call.1} parent=1 // pred_fallthru
      _
    // Predicated region
    $region58: #{tpu_custom_call.1} parent=1 // pred_check
      _
    $region59: #{tpu_custom_call.1} parent=1 // pred_check_branch
      %99 = sbr.rel (0) target = $region61
    $region60: #{tpu_custom_call.1} parent=1 // pred_region
      %101 = dma.done [#allocation9], 2048
    $region61: #{tpu_custom_call.1} parent=1 // pred_fallthru
      _
    %v102 = vlaneseq
    %v103 = vshrl.u32 %v102, 7
    %v104 = vadd.s32 %v103, 8
    %vm105 = vcmp.lt.s32.totalorder %v103, 8
    %vm106 = vcmp.lt.s32.totalorder %v104, 8
    %v107 = vsel %vm105, 1, 0
    %v108 = vsel %vm106, 1, 0
    %v109 = vcvt.s32.f32 %v107
    %v110 = vcvt.s32.f32 %v108
    %v111 = vld [vmem:[#allocation2] sm:$0xff]
    %v112 = vld [vmem:[#allocation2 + $0x8] sm:$0xff]
    %v113 = vld [vmem:[#allocation5] sm:$0xff]
    %v114 = vld [vmem:[#allocation5 + $0x8] sm:$0xff]
    %v115 = vld [vmem:[#allocation5 + $0x10] sm:$0xff]
    %v116 = vld [vmem:[#allocation5 + $0x18] sm:$0xff]
    %v117 = vld [vmem:[#allocation5 + $0x20] sm:$0xff]
    %v118 = vld [vmem:[#allocation5 + $0x28] sm:$0xff]
    %v119 = vld [vmem:[#allocation5 + $0x30] sm:$0xff]
    %v120 = vld [vmem:[#allocation5 + $0x38] sm:$0xff]
    %v121 = vld [vmem:[#allocation5 + $0x40] sm:$0xff]
    %v122 = vld [vmem:[#allocation5 + $0x48] sm:$0xff]
    %v123 = vld [vmem:[#allocation5 + $0x50] sm:$0xff]
    %v124 = vld [vmem:[#allocation5 + $0x58] sm:$0xff]
    %v125 = vld [vmem:[#allocation5 + $0x60] sm:$0xff]
    %v126 = vld [vmem:[#allocation5 + $0x68] sm:$0xff]
    %v127 = vld [vmem:[#allocation5 + $0x70] sm:$0xff]
    %v128 = vld [vmem:[#allocation5 + $0x78] sm:$0xff]
    %v129 = vld [vmem:[%s2] sm:$0x1]
    %v131 = vperm.slane %v129, 0
    %133 = vmatpush.msra.mxu0 %v128
    %134 = vmatpush.msra.mxu0 %v127
    %135 = vmatpush.msra.mxu0 %v126
    %136 = vmatpush.msra.mxu0 %v125
    %137 = vmatpush.msra.mxu0 %v124
    %138 = vmatpush.msra.mxu0 %v123
    %139 = vmatpush.msra.mxu0 %v122
    %140 = vmatpush.msra.mxu0 %v121
    %141 = vmatpush.msra.mxu0 %v120
    %142 = vmatpush.msra.mxu0 %v119
    %143 = vmatpush.msra.mxu0 %v118
    %144 = vmatpush.msra.mxu0 %v117
    %145 = vmatpush.msra.mxu0 %v116
    %146 = vmatpush.msra.mxu0 %v115
    %147 = vmatpush.msra.mxu0 %v114
    %148 = vmatpush.msra.mxu0 %v113
    %149 = vmatmul.f32.gmra.mxu0 %v111
    %v150 = vpop.f32.mrf.mxu0
    %v151 = vadd.f32 %v131, %v150
    %152 = vmatmul.f32.gmra.mxu0 %v112
    %v153 = vpop.f32.mrf.mxu0
    %v154 = vadd.f32 %v131, %v153
    %155 = vdwg.mxu0
    %v156 = vld [vmem:[%s3] sm:$0x1]
    %v157 = vld [vmem:[%s4] sm:$0x1]
    %v158 = vmul.f32 %v151, %v109
    %v159 = vmul.f32 %v154, %v110
    %v160 = vadd.f32 %v158, %v159
    %v161 = vrot.slane %v160, 4
    %v162 = vadd.f32 %v160, %v161
    %v163 = vrot.slane %v162, 2
    %v164 = vadd.f32 %v162, %v163
    %v165 = vrot.slane %v164, 1
    %v166 = vadd.f32 %v164, %v165
    %v167 = vmul.f32 %v151, %v151
    %v168 = vmul.f32 %v154, %v154
    %v169 = vmul.f32 %v167, %v109
    %v170 = vmul.f32 %v168, %v110
    %v171 = vadd.f32 %v169, %v170
    %v172 = vrot.slane %v171, 4
    %v173 = vadd.f32 %v171, %v172
    %v174 = vrot.slane %v173, 2
    %v175 = vadd.f32 %v173, %v174
    %v176 = vrot.slane %v175, 1
    %v177 = vadd.f32 %v175, %v176
    %v178 = vmul.f32 %v166, 0.125
    %v179 = vmul.f32 %v177, 0.125
    %v180 = vmul.f32 %v178, %v178
    %v181 = vsub.f32 %v179, %v180
    %v182 = vmax.f32 %v181, 0.0
    %v183 = vadd.f32 %v182, 1e-05
    %v184 = vrsqrt.pop %v183
    %v185 = vmul.f32 %v184, %v183
    %v186 = vmul.f32 %v185, %v184
    %v187 = vmul.f32 0.5, %v186
    %v188 = vsub.f32 1.5, %v187
    %v189 = vmul.f32 %v184, %v188
    %vm190 = vweird.f32 %v183
    %vm191 = vweird.f32 %v184
    %vm192 = vmor %vm190, %vm191
    %v193 = vsel %vm192, %v184, %v189
    %v194 = vmul.f32 %v193, %v156
    %v195 = vmul.f32 %v178, %v194
    %v196 = vsub.f32 %v157, %v195
    %v197 = vperm.slane %v194, 0
    %v198 = vmul.f32 %v151, %v197
    %v199 = vmul.f32 %v154, %v197
    %v201 = vperm.slane %v196, 0
    %v203 = vadd.f32 %v198, %v201
    %v204 = vadd.f32 %v199, %v201
    %v205 = vmax.f32 %v203, 0.0
    %v206 = vmax.f32 %v204, 0.0
    %v207 = vld [vmem:[#allocation7] sm:$0xff]
    %v208 = vld [vmem:[#allocation7 + $0x8] sm:$0xff]
    %v209 = vld [vmem:[#allocation7 + $0x10] sm:$0xff]
    %v210 = vld [vmem:[#allocation7 + $0x18] sm:$0xff]
    %v211 = vld [vmem:[#allocation7 + $0x20] sm:$0xff]
    %v212 = vld [vmem:[#allocation7 + $0x28] sm:$0xff]
    %v213 = vld [vmem:[#allocation7 + $0x30] sm:$0xff]
    %v214 = vld [vmem:[#allocation7 + $0x38] sm:$0xff]
    %v215 = vld [vmem:[#allocation7 + $0x40] sm:$0xff]
    %v216 = vld [vmem:[#allocation7 + $0x48] sm:$0xff]
    %v217 = vld [vmem:[#allocation7 + $0x50] sm:$0xff]
    %v218 = vld [vmem:[#allocation7 + $0x58] sm:$0xff]
    %v219 = vld [vmem:[#allocation7 + $0x60] sm:$0xff]
    %v220 = vld [vmem:[#allocation7 + $0x68] sm:$0xff]
    %v221 = vld [vmem:[#allocation7 + $0x70] sm:$0xff]
    %v222 = vld [vmem:[#allocation7 + $0x78] sm:$0xff]
    %v223 = vld [vmem:[%s6] sm:$0x1]
    %v225 = vperm.slane %v223, 0
    %227 = vmatpush.msra.mxu0 %v222
    %228 = vmatpush.msra.mxu0 %v221
    %229 = vmatpush.msra.mxu0 %v220
    %230 = vmatpush.msra.mxu0 %v219
    %231 = vmatpush.msra.mxu0 %v218
    %232 = vmatpush.msra.mxu0 %v217
    %233 = vmatpush.msra.mxu0 %v216
    %234 = vmatpush.msra.mxu0 %v215
    %235 = vmatpush.msra.mxu0 %v214
    %236 = vmatpush.msra.mxu0 %v213
    %237 = vmatpush.msra.mxu0 %v212
    %238 = vmatpush.msra.mxu0 %v211
    %239 = vmatpush.msra.mxu0 %v210
    %240 = vmatpush.msra.mxu0 %v209
    %241 = vmatpush.msra.mxu0 %v208
    %242 = vmatpush.msra.mxu0 %v207
    %243 = vmatmul.f32.gmra.mxu0 %v205
    %v244 = vpop.f32.mrf.mxu0
    %v245 = vadd.f32 %v225, %v244
    %246 = vmatmul.f32.gmra.mxu0 %v206
    %v247 = vpop.f32.mrf.mxu0
    %v248 = vadd.f32 %v225, %v247
    %249 = vdwg.mxu0
    %v250 = vld [vmem:[%s7] sm:$0x1]
    %v251 = vld [vmem:[%s8] sm:$0x1]
    %v252 = vmul.f32 %v245, %v109
    %v253 = vmul.f32 %v248, %v110
    %v254 = vadd.f32 %v252, %v253
    %v255 = vrot.slane %v254, 4
    %v256 = vadd.f32 %v254, %v255
    %v257 = vrot.slane %v256, 2
    %v258 = vadd.f32 %v256, %v257
    %v259 = vrot.slane %v258, 1
    %v260 = vadd.f32 %v258, %v259
    %v261 = vmul.f32 %v245, %v245
    %v262 = vmul.f32 %v248, %v248
    %v263 = vmul.f32 %v261, %v109
    %v264 = vmul.f32 %v262, %v110
    %v265 = vadd.f32 %v263, %v264
    %v266 = vrot.slane %v265, 4
    %v267 = vadd.f32 %v265, %v266
    %v268 = vrot.slane %v267, 2
    %v269 = vadd.f32 %v267, %v268
    %v270 = vrot.slane %v269, 1
    %v271 = vadd.f32 %v269, %v270
    %v272 = vmul.f32 %v260, 0.125
    %v273 = vmul.f32 %v271, 0.125
    %v274 = vmul.f32 %v272, %v272
    %v275 = vsub.f32 %v273, %v274
    %v276 = vmax.f32 %v275, 0.0
    %v277 = vadd.f32 %v276, 1e-05
    %v278 = vrsqrt.pop %v277
    %v279 = vmul.f32 %v278, %v277
    %v280 = vmul.f32 %v279, %v278
    %v281 = vmul.f32 0.5, %v280
    %v282 = vsub.f32 1.5, %v281
    %v283 = vmul.f32 %v278, %v282
    %vm284 = vweird.f32 %v277
    %vm285 = vweird.f32 %v278
    %vm286 = vmor %vm284, %vm285
    %v287 = vsel %vm286, %v278, %v283
    %v288 = vmul.f32 %v287, %v250
    %v289 = vmul.f32 %v272, %v288
    %v290 = vsub.f32 %v251, %v289
    %v291 = vperm.slane %v288, 0
    %v292 = vmul.f32 %v245, %v291
    %v293 = vmul.f32 %v248, %v291
    %v295 = vperm.slane %v290, 0
    %v297 = vadd.f32 %v292, %v295
    %v298 = vadd.f32 %v293, %v295
    %v299 = vmax.f32 %v297, 0.0
    %v300 = vmax.f32 %v298, 0.0
    %v301 = vld [vmem:[#allocation8] sm:$0xff]
    %v302 = vld [vmem:[#allocation8 + $0x8] sm:$0xff]
    %v303 = vld [vmem:[#allocation8 + $0x10] sm:$0xff]
    %v304 = vld [vmem:[#allocation8 + $0x18] sm:$0xff]
    %v305 = vld [vmem:[#allocation8 + $0x20] sm:$0xff]
    %v306 = vld [vmem:[#allocation8 + $0x28] sm:$0xff]
    %v307 = vld [vmem:[#allocation8 + $0x30] sm:$0xff]
    %v308 = vld [vmem:[#allocation8 + $0x38] sm:$0xff]
    %v309 = vld [vmem:[#allocation8 + $0x40] sm:$0xff]
    %v310 = vld [vmem:[#allocation8 + $0x48] sm:$0xff]
    %v311 = vld [vmem:[#allocation8 + $0x50] sm:$0xff]
    %v312 = vld [vmem:[#allocation8 + $0x58] sm:$0xff]
    %v313 = vld [vmem:[#allocation8 + $0x60] sm:$0xff]
    %v314 = vld [vmem:[#allocation8 + $0x68] sm:$0xff]
    %v315 = vld [vmem:[#allocation8 + $0x70] sm:$0xff]
    %v316 = vld [vmem:[#allocation8 + $0x78] sm:$0xff]
    %v317 = vld [vmem:[%s10] sm:$0x1]
    %v319 = vperm.slane %v317, 0
    %321 = vmatpush.msra.mxu0 %v316
    %322 = vmatpush.msra.mxu0 %v315
    %323 = vmatpush.msra.mxu0 %v314
    %324 = vmatpush.msra.mxu0 %v313
    %325 = vmatpush.msra.mxu0 %v312
    %326 = vmatpush.msra.mxu0 %v311
    %327 = vmatpush.msra.mxu0 %v310
    %328 = vmatpush.msra.mxu0 %v309
    %329 = vmatpush.msra.mxu0 %v308
    %330 = vmatpush.msra.mxu0 %v307
    %331 = vmatpush.msra.mxu0 %v306
    %332 = vmatpush.msra.mxu0 %v305
    %333 = vmatpush.msra.mxu0 %v304
    %334 = vmatpush.msra.mxu0 %v303
    %335 = vmatpush.msra.mxu0 %v302
    %336 = vmatpush.msra.mxu0 %v301
    %337 = vmatmul.f32.gmra.mxu0 %v299
    %v338 = vpop.f32.mrf.mxu0
    %v339 = vadd.f32 %v319, %v338
    %340 = vmatmul.f32.gmra.mxu0 %v300
    %v341 = vpop.f32.mrf.mxu0
    %v342 = vadd.f32 %v319, %v341
    %343 = vdwg.mxu0
    %344 = vst [vmem:[#allocation10] sm:$0xff] %v339
    %345 = vst [vmem:[#allocation10 + $0x8] sm:$0xff] %v342
    // Predicated region
    $region62: #{tpu_custom_call.1} parent=1 // pred_check
      _
    $region63: #{tpu_custom_call.1} parent=1 // pred_check_branch
      %347 = sbr.rel (0) target = $region65
    $region64: #{tpu_custom_call.1} parent=1 // pred_region
      %349 = vsyncadd [#allocation4], 0
      %s350 = sshll.u32 [#allocation10], 4
      %s351 = int_to_ptr.vmem [resolvable:$true] %s350
      %s352 = sshll.u32 %s11, 4
      %s353 = int_to_ptr.hbm [resolvable:$true] %s352
      %358 = dma.vmem_to_hbm [thread:$0]  %s351, 256, %s353, [#allocation4], 128, 128, 8
    $region65: #{tpu_custom_call.1} parent=1 // pred_fallthru
      _
    // Predicated region
    $region66: #{tpu_custom_call.1} parent=1 // pred_check
      _
    $region67: #{tpu_custom_call.1} parent=1 // pred_check_branch
      %360 = sbr.rel (0) target = $region69
    $region68: #{tpu_custom_call.1} parent=1 // pred_region
      %362 = dma.done [#allocation4], 256
    $region69: #{tpu_custom_call.1} parent=1 // pred_fallthru
      _
    %363 = vsyncpa [#allocation3], 1
    %364 = vsyncpa [#allocation6], 1
    %365 = vsyncpa [#allocation9], 1
    %366 = vsyncpa [#allocation4], 1

</llo_original>
